<compile_context>
chip_gen: v7x
topology: tpu7x:2x2x1
jax: 0.10.0
libtpu: 0.0.40
codegen_flags: <defaults>
</compile_context>

<pallas_src>
import jax
import jax.numpy as jnp
from jax.experimental import pallas as pl
from jax.experimental.pallas import tpu as pltpu

EPS = 1e-5


def _round_up(n, m):
    return ((n + m - 1) // m) * m


def _make_dni_kernel(conditioned, d_x, hidden, out_pad):
    """Build the fused kernel. Static config (conditioned/d_x/shapes) is closed over."""

    def bn_relu(h, gamma, beta):
        # Train-mode BatchNorm1d: per-feature batch mean, biased batch var, eps=1e-5.
        # One-pass stats: var = E[h^2] - E[h]^2 (clamped for fp safety).
        m = jnp.mean(h, axis=0, keepdims=True)
        var = jnp.maximum(jnp.mean(h * h, axis=0, keepdims=True) - m * m, 0.0)
        h = (h - m) * jax.lax.rsqrt(var + EPS) * gamma + beta
        return jnp.maximum(h, 0.0)

    def body(x, y, w1_ref, w2_ref, w3_ref, vec_ref, o_ref):
        # Packed per-layer vectors (static slices -> cheap views).
        g1 = vec_ref[0:1, :hidden]
        be1 = vec_ref[1:2, :hidden]
        g2 = vec_ref[2:3, :hidden]
        be2 = vec_ref[3:4, :hidden]
        b3 = vec_ref[4:5, :out_pad]

        # ---- layer1: Linear (bias cancelled by train-mode BN) -> BN -> ReLU ----
        if y is None:
            h = jnp.dot(x.astype(jnp.bfloat16), w1_ref[...],
                        preferred_element_type=jnp.float32)
        else:
            # Fused concat: x @ w1[:d] + y @ w1[d:], static slices of the weight ref.
            h = (jnp.dot(x.astype(jnp.bfloat16), w1_ref[:d_x, :],
                         preferred_element_type=jnp.float32)
                 + jnp.dot(y.astype(jnp.bfloat16), w1_ref[d_x:, :],
                           preferred_element_type=jnp.float32))
        h = bn_relu(h, g1, be1)

        # ---- layer2: Linear (bias cancelled by train-mode BN) -> BN -> ReLU ----
        h = jnp.dot(h.astype(jnp.bfloat16), w2_ref[...],
                    preferred_element_type=jnp.float32)
        h = bn_relu(h, g2, be2)

        # ---- layer3: Linear (lane-dense padded output) ----
        o_ref[...] = (jnp.dot(h.astype(jnp.bfloat16), w3_ref[...],
                              preferred_element_type=jnp.float32)
                      + b3).astype(o_ref.dtype)

    if conditioned:
        def kernel(x_ref, y_ref, w1_ref, w2_ref, w3_ref, vec_ref, o_ref):
            body(x_ref[...], y_ref[...], w1_ref, w2_ref, w3_ref, vec_ref, o_ref)
    else:
        def kernel(x_ref, w1_ref, w2_ref, w3_ref, vec_ref, o_ref):
            body(x_ref[...], None, w1_ref, w2_ref, w3_ref, vec_ref, o_ref)
    return kernel


def prepare_params(params, input_dims):
    """One-time packing of PyTorch-style params into kernel-ready operands."""
    (w1, b1, g1, be1, w2, b2, g2, be2, w3, b3) = params
    del b1, b2  # exactly cancelled by the following train-mode BatchNorm1d
    hidden = w1.shape[1]
    out_pad = _round_up(max(input_dims, 128), 128)       # lane-dense output width
    w_vec = max(hidden, out_pad)

    w1b = w1.astype(jnp.bfloat16)
    w2b = w2.astype(jnp.bfloat16)
    w3p = jnp.zeros((hidden, out_pad), jnp.bfloat16).at[:, :input_dims].set(
        w3.astype(jnp.bfloat16))

    vecs = jnp.zeros((5, w_vec), jnp.float32)
    vecs = vecs.at[0, :hidden].set(g1[0])
    vecs = vecs.at[1, :hidden].set(be1[0])
    vecs = vecs.at[2, :hidden].set(g2[0])
    vecs = vecs.at[3, :hidden].set(be2[0])
    vecs = vecs.at[4, :input_dims].set(b3[0])

    return dict(w1=w1b, w2=w2b, w3=w3p, vecs=vecs,
                hidden=hidden, input_dims=input_dims, out_pad=out_pad)


def dni_linear_forward(x, prep, y=None, conditioned=False):
    """Forward pass matching the PyTorch dni_linear module (train-mode BN)."""
    B = x.shape[0]
    hidden, input_dims, out_pad = prep["hidden"], prep["input_dims"], prep["out_pad"]
    d_x = x.shape[1]

    kernel = _make_dni_kernel(conditioned, d_x, hidden, out_pad)
    if conditioned:
        assert y is not None
        args = (x, y, prep["w1"], prep["w2"], prep["w3"], prep["vecs"])
    else:
        args = (x, prep["w1"], prep["w2"], prep["w3"], prep["vecs"])

    vmem = pl.BlockSpec(memory_space=pltpu.MemorySpace.VMEM)
    out = pl.pallas_call(
        kernel,
        out_shape=jax.ShapeDtypeStruct((B, out_pad), jnp.float32),
        in_specs=[vmem] * len(args),
        out_specs=vmem,
    )(*args)
    return out[:, :input_dims]


def init_params(key, input_dims, num_classes, hidden, conditioned):
    """PyTorch-parity parameters (f32, with Linear biases and BN affine params)."""
    dni_in = input_dims + num_classes if conditioned else input_dims
    ks = jax.random.split(key, 6)
    scale1 = 1.0 / jnp.sqrt(dni_in)
    scale2 = 1.0 / jnp.sqrt(hidden)
    w1 = jax.random.uniform(ks[0], (dni_in, hidden), jnp.float32, -scale1, scale1)
    b1 = jax.random.uniform(ks[1], (1, hidden), jnp.float32, -scale1, scale1)
    g1 = jnp.ones((1, hidden), jnp.float32)        # BatchNorm1d weight
    be1 = jnp.zeros((1, hidden), jnp.float32)      # BatchNorm1d bias
    w2 = jax.random.uniform(ks[2], (hidden, hidden), jnp.float32, -scale2, scale2)
    b2 = jax.random.uniform(ks[3], (1, hidden), jnp.float32, -scale2, scale2)
    g2 = jnp.ones((1, hidden), jnp.float32)
    be2 = jnp.zeros((1, hidden), jnp.float32)
    w3 = jax.random.uniform(ks[4], (hidden, input_dims), jnp.float32, -scale2, scale2)
    b3 = jax.random.uniform(ks[5], (1, input_dims), jnp.float32, -scale2, scale2)
    return (w1, b1, g1, be1, w2, b2, g2, be2, w3, b3)


def dni_linear_reference(x, params, y=None, conditioned=False):
    """Plain-JAX f32 reference replicating the PyTorch forward (train-mode BN),
    including b1/b2 (which the kernel drops because BN cancels them)."""
    if conditioned:
        x = jnp.concatenate((x, y), axis=1)
    (w1, b1, g1, be1, w2, b2, g2, be2, w3, b3) = params

    def bn_relu(h, g, be):
        m = jnp.mean(h, axis=0, keepdims=True)
        v = jnp.mean((h - m) ** 2, axis=0, keepdims=True)
        return jnp.maximum((h - m) / jnp.sqrt(v + EPS) * g + be, 0.0)

    h = bn_relu(x @ w1 + b1, g1, be1)
    h = bn_relu(h @ w2 + b2, g2, be2)
    return h @ w3 + b3


# TODO(synk): BatchNorm1d running_mean/running_var updates (training-mode buffer
# side effects) are not tracked; only the forward output is computed.

if __name__ == "__main__":
    # Small, deterministic problem sizes.
    batch = 8
    input_dims = 32
    num_classes = 8
    hidden = 128
    conditioned = True

    key = jax.random.PRNGKey(0)
    kx, ky, kp = jax.random.split(key, 3)
    x = jax.random.normal(kx, (batch, input_dims), jnp.float32)
    y = jax.random.normal(ky, (batch, num_classes), jnp.float32)
    params = init_params(kp, input_dims, num_classes, hidden, conditioned)
    prep = prepare_params(params, input_dims)   # one-time packing (hoisted out of the hot loop)

    out = dni_linear_forward(x, prep, y=y, conditioned=conditioned)
    out = jax.block_until_ready(out)

    ref = dni_linear_reference(x, params, y=y, conditioned=conditioned)
    assert out.shape == (batch, input_dims)
    # bf16 MXU operands -> tolerance relaxed vs. the pure-f32 reference.
    assert jnp.allclose(out, ref, rtol=2e-2, atol=2e-2), "mismatch vs reference"

    print("KERNEL_OK")
</pallas_src>

<mosaic_0001>
module attributes {stable_mosaic.version = 11 : i64} {
  func.func @kernel(%arg0: memref<8x32xf32, #tpu.memory_space<vmem>>, %arg1: memref<8x8xf32, #tpu.memory_space<vmem>>, %arg2: memref<40x128xbf16, #tpu.memory_space<vmem>>, %arg3: memref<128x128xbf16, #tpu.memory_space<vmem>>, %arg4: memref<128x128xbf16, #tpu.memory_space<vmem>>, %arg5: memref<5x128xf32, #tpu.memory_space<vmem>>, %arg6: memref<8x128xf32, #tpu.memory_space<vmem>>) attributes {dimension_semantics = [], scalar_prefetch = 0 : i64, scratch_operands = 0 : i64, tpu.core_type = #tpu.core_type<tc>} {
    %c0 = arith.constant 0 : index
    %c0_0 = arith.constant 0 : index
    %0 = vector.load %arg0[%c0, %c0_0] : memref<8x32xf32, #tpu.memory_space<vmem>>, vector<8x32xf32>
    %c0_1 = arith.constant 0 : index
    %c0_2 = arith.constant 0 : index
    %1 = vector.load %arg1[%c0_1, %c0_2] : memref<8x8xf32, #tpu.memory_space<vmem>>, vector<8x8xf32>
    %c0_3 = arith.constant 0 : index
    %c0_4 = arith.constant 0 : index
    %2 = vector.load %arg5[%c0_3, %c0_4] : memref<5x128xf32, #tpu.memory_space<vmem>>, vector<1x128xf32>
    %c1 = arith.constant 1 : index
    %c0_5 = arith.constant 0 : index
    %3 = vector.load %arg5[%c1, %c0_5] : memref<5x128xf32, #tpu.memory_space<vmem>>, vector<1x128xf32>
    %c2 = arith.constant 2 : index
    %c0_6 = arith.constant 0 : index
    %4 = vector.load %arg5[%c2, %c0_6] : memref<5x128xf32, #tpu.memory_space<vmem>>, vector<1x128xf32>
    %c3 = arith.constant 3 : index
    %c0_7 = arith.constant 0 : index
    %5 = vector.load %arg5[%c3, %c0_7] : memref<5x128xf32, #tpu.memory_space<vmem>>, vector<1x128xf32>
    %c4 = arith.constant 4 : index
    %c0_8 = arith.constant 0 : index
    %6 = vector.load %arg5[%c4, %c0_8] : memref<5x128xf32, #tpu.memory_space<vmem>>, vector<1x128xf32>
    %7 = arith.truncf %0 : vector<8x32xf32> to vector<8x32xbf16>
    %c0_9 = arith.constant 0 : index
    %c0_10 = arith.constant 0 : index
    %8 = vector.load %arg2[%c0_9, %c0_10] : memref<40x128xbf16, #tpu.memory_space<vmem>>, vector<32x128xbf16>
    %cst = arith.constant dense<0.000000e+00> : vector<8x128xf32>
    %9 = tpu.matmul %7, %8, %cst {dimension_numbers = #tpu.dot_dimension_numbers<[1], [0], [0], [1], [0, 0, 1, 1], [], []>} : vector<8x32xbf16>, vector<32x128xbf16>, vector<8x128xf32> -> vector<8x128xf32>
    %10 = arith.truncf %1 : vector<8x8xf32> to vector<8x8xbf16>
    %c32 = arith.constant 32 : index
    %c0_11 = arith.constant 0 : index
    %11 = vector.load %arg2[%c32, %c0_11] : memref<40x128xbf16, #tpu.memory_space<vmem>>, vector<8x128xbf16>
    %cst_12 = arith.constant dense<0.000000e+00> : vector<8x128xf32>
    %12 = tpu.matmul %10, %11, %cst_12 {dimension_numbers = #tpu.dot_dimension_numbers<[1], [0], [0], [1], [0, 0, 1, 1], [], []>} : vector<8x8xbf16>, vector<8x128xbf16>, vector<8x128xf32> -> vector<8x128xf32>
    %13 = arith.addf %9, %12 : vector<8x128xf32>
    %cst_13 = arith.constant dense<0.000000e+00> : vector<128xf32>
    %14 = vector.multi_reduction <add>, %13, %cst_13 [0] : vector<8x128xf32> to vector<128xf32>
    %15 = vector.shape_cast %14 : vector<128xf32> to vector<1x128xf32>
    %cst_14 = arith.constant 8.000000e+00 : f32
    %16 = vector.broadcast %cst_14 : f32 to vector<1x128xf32>
    %17 = arith.divf %15, %16 : vector<1x128xf32>
    %18 = arith.mulf %13, %13 : vector<8x128xf32>
    %cst_15 = arith.constant dense<0.000000e+00> : vector<128xf32>
    %19 = vector.multi_reduction <add>, %18, %cst_15 [0] : vector<8x128xf32> to vector<128xf32>
    %20 = vector.shape_cast %19 : vector<128xf32> to vector<1x128xf32>
    %cst_16 = arith.constant 8.000000e+00 : f32
    %21 = vector.broadcast %cst_16 : f32 to vector<1x128xf32>
    %22 = arith.divf %20, %21 : vector<1x128xf32>
    %23 = arith.mulf %17, %17 : vector<1x128xf32>
    %24 = arith.subf %22, %23 : vector<1x128xf32>
    %cst_17 = arith.constant 0.000000e+00 : f32
    %25 = vector.broadcast %cst_17 : f32 to vector<1x128xf32>
    %26 = arith.maximumf %24, %25 : vector<1x128xf32>
    %27 = vector.broadcast %17 : vector<1x128xf32> to vector<8x128xf32>
    %28 = arith.subf %13, %27 : vector<8x128xf32>
    %cst_18 = arith.constant 9.99999974E-6 : f32
    %29 = vector.broadcast %cst_18 : f32 to vector<1x128xf32>
    %30 = arith.addf %26, %29 : vector<1x128xf32>
    %31 = math.rsqrt %30 : vector<1x128xf32>
    %32 = vector.broadcast %31 : vector<1x128xf32> to vector<8x128xf32>
    %33 = arith.mulf %28, %32 : vector<8x128xf32>
    %34 = vector.broadcast %2 : vector<1x128xf32> to vector<8x128xf32>
    %35 = arith.mulf %33, %34 : vector<8x128xf32>
    %36 = vector.broadcast %3 : vector<1x128xf32> to vector<8x128xf32>
    %37 = arith.addf %35, %36 : vector<8x128xf32>
    %cst_19 = arith.constant 0.000000e+00 : f32
    %38 = vector.broadcast %cst_19 : f32 to vector<8x128xf32>
    %39 = arith.maximumf %37, %38 : vector<8x128xf32>
    %40 = arith.truncf %39 : vector<8x128xf32> to vector<8x128xbf16>
    %c0_20 = arith.constant 0 : index
    %c0_21 = arith.constant 0 : index
    %41 = vector.load %arg3[%c0_20, %c0_21] : memref<128x128xbf16, #tpu.memory_space<vmem>>, vector<128x128xbf16>
    %cst_22 = arith.constant dense<0.000000e+00> : vector<8x128xf32>
    %42 = tpu.matmul %40, %41, %cst_22 {dimension_numbers = #tpu.dot_dimension_numbers<[1], [0], [0], [1], [0, 0, 1, 1], [], []>} : vector<8x128xbf16>, vector<128x128xbf16>, vector<8x128xf32> -> vector<8x128xf32>
    %cst_23 = arith.constant dense<0.000000e+00> : vector<128xf32>
    %43 = vector.multi_reduction <add>, %42, %cst_23 [0] : vector<8x128xf32> to vector<128xf32>
    %44 = vector.shape_cast %43 : vector<128xf32> to vector<1x128xf32>
    %cst_24 = arith.constant 8.000000e+00 : f32
    %45 = vector.broadcast %cst_24 : f32 to vector<1x128xf32>
    %46 = arith.divf %44, %45 : vector<1x128xf32>
    %47 = arith.mulf %42, %42 : vector<8x128xf32>
    %cst_25 = arith.constant dense<0.000000e+00> : vector<128xf32>
    %48 = vector.multi_reduction <add>, %47, %cst_25 [0] : vector<8x128xf32> to vector<128xf32>
    %49 = vector.shape_cast %48 : vector<128xf32> to vector<1x128xf32>
    %cst_26 = arith.constant 8.000000e+00 : f32
    %50 = vector.broadcast %cst_26 : f32 to vector<1x128xf32>
    %51 = arith.divf %49, %50 : vector<1x128xf32>
    %52 = arith.mulf %46, %46 : vector<1x128xf32>
    %53 = arith.subf %51, %52 : vector<1x128xf32>
    %cst_27 = arith.constant 0.000000e+00 : f32
    %54 = vector.broadcast %cst_27 : f32 to vector<1x128xf32>
    %55 = arith.maximumf %53, %54 : vector<1x128xf32>
    %56 = vector.broadcast %46 : vector<1x128xf32> to vector<8x128xf32>
    %57 = arith.subf %42, %56 : vector<8x128xf32>
    %cst_28 = arith.constant 9.99999974E-6 : f32
    %58 = vector.broadcast %cst_28 : f32 to vector<1x128xf32>
    %59 = arith.addf %55, %58 : vector<1x128xf32>
    %60 = math.rsqrt %59 : vector<1x128xf32>
    %61 = vector.broadcast %60 : vector<1x128xf32> to vector<8x128xf32>
    %62 = arith.mulf %57, %61 : vector<8x128xf32>
    %63 = vector.broadcast %4 : vector<1x128xf32> to vector<8x128xf32>
    %64 = arith.mulf %62, %63 : vector<8x128xf32>
    %65 = vector.broadcast %5 : vector<1x128xf32> to vector<8x128xf32>
    %66 = arith.addf %64, %65 : vector<8x128xf32>
    %cst_29 = arith.constant 0.000000e+00 : f32
    %67 = vector.broadcast %cst_29 : f32 to vector<8x128xf32>
    %68 = arith.maximumf %66, %67 : vector<8x128xf32>
    %69 = arith.truncf %68 : vector<8x128xf32> to vector<8x128xbf16>
    %c0_30 = arith.constant 0 : index
    %c0_31 = arith.constant 0 : index
    %70 = vector.load %arg4[%c0_30, %c0_31] : memref<128x128xbf16, #tpu.memory_space<vmem>>, vector<128x128xbf16>
    %cst_32 = arith.constant dense<0.000000e+00> : vector<8x128xf32>
    %71 = tpu.matmul %69, %70, %cst_32 {dimension_numbers = #tpu.dot_dimension_numbers<[1], [0], [0], [1], [0, 0, 1, 1], [], []>} : vector<8x128xbf16>, vector<128x128xbf16>, vector<8x128xf32> -> vector<8x128xf32>
    %72 = vector.broadcast %6 : vector<1x128xf32> to vector<8x128xf32>
    %73 = arith.addf %71, %72 : vector<8x128xf32>
    %c0_33 = arith.constant 0 : index
    %c0_34 = arith.constant 0 : index
    %74 = vector.load %arg6[%c0_33, %c0_34] : memref<8x128xf32, #tpu.memory_space<vmem>>, vector<8x128xf32>
    tpu.vector_store %arg6[%c0_33, %c0_34], %73 {strides = array<i32>} : memref<8x128xf32, #tpu.memory_space<vmem>>, vector<8x128xf32>,
    return
  }
}

</mosaic_0001>

<llo_original>
// kernel: tpu_custom_call.1
$region0: #{tpu_custom_call.1}
  #allocation0 [shape = 'u32[]', space=smem, size = 0x4, offset = 0x4, fixed_abs, tag = 'smem constant byte address 0x4 - core index']
  #allocation1 [shape = 'u32[144,128]{1,0:T(1,128)}', space=vmem, size = 0x12000, scoped, tag = 'internal scratch']
  %s0 = inlined_call_operand.hbm [shape: f32[8,32], index: 0, kind: input, shape index: {}]
  %s1 = inlined_call_operand.hbm [shape: f32[8,8], index: 1, kind: input, shape index: {}]
  %s2 = inlined_call_operand.hbm [shape: bf16[40,128], index: 2, kind: input, shape index: {}]
  %s3 = inlined_call_operand.hbm [shape: bf16[128,128], index: 3, kind: input, shape index: {}]
  %s4 = inlined_call_operand.hbm [shape: bf16[128,128], index: 4, kind: input, shape index: {}]
  %s5 = inlined_call_operand.vmem [shape: f32[5,128], index: 5, kind: input, shape index: {}]
  %s6 = inlined_call_operand.hbm [shape: f32[8,128], index: 6, kind: output, shape index: {}]
  %s7 = sld [smem:[#allocation0]]
  $region54: #{tpu_custom_call.1} parent=0
    _
  %s9 = ssub.s32 1, %s7
  %s10 = scalar_select 0, %s9, %s7
  $region1: #{tpu_custom_call.1} parent=0
    #allocation2 [shape = 'u8[4096]{0}', space=vmem, size = 0x1000, scoped, tag = 'input window, operand 0, single buffered']
    #allocation3 [shape = 's32[1]{0}', space=sflag, size = 0x4, scoped, tag = 'scoped memory for tpu_custom_call.1']
    #allocation4 [shape = 's32[1]{0}', space=sflag, size = 0x4, scoped, tag = 'scoped memory for tpu_custom_call.1']
    #allocation5 [shape = 'u8[4096]{0}', space=vmem, size = 0x1000, scoped, tag = 'input window, operand 1, single buffered']
    #allocation6 [shape = 's32[1]{0}', space=sflag, size = 0x4, scoped, tag = 'scoped memory for tpu_custom_call.1']
    #allocation7 [shape = 'u8[10240]{0}', space=vmem, size = 0x2800, scoped, tag = 'input window, operand 2, single buffered']
    #allocation8 [shape = 'u8[32768]{0}', space=vmem, size = 0x8000, scoped, tag = 'input window, operand 3, single buffered']
    #allocation9 [shape = 's32[1]{0}', space=sflag, size = 0x4, scoped, tag = 'scoped memory for tpu_custom_call.1']
    #allocation10 [shape = 'u8[32768]{0}', space=vmem, size = 0x8000, scoped, tag = 'input window, operand 4, single buffered']
    #allocation11 [shape = 'u8[4096]{0}', space=vmem, size = 0x1000, scoped, tag = 'output window, operand 0, single buffered']
    %11 = vsyncpa [#allocation3], 0
    %12 = vsyncpa [#allocation6], 0
    %13 = vsyncpa [#allocation9], 0
    %14 = vsyncpa [#allocation4], 0
    // Predicated region
    $region2: #{tpu_custom_call.1} parent=1 // pred_check
      _
    $region3: #{tpu_custom_call.1} parent=1 // pred_check_branch
      %16 = sbr.rel (0) target = $region5
    $region4: #{tpu_custom_call.1} parent=1 // pred_region
      %s18 = ssub.s32 128, 128
      %19 = vsyncadd [#allocation3], %s18
      %s21 = sshll.u32 [#allocation2], 4
      %s22 = int_to_ptr.vmem [resolvable:$true] %s21
      %24 = dma.hbm_to_vmem [thread:$0]  %s0, 128, %s22, [#allocation3]
    $region5: #{tpu_custom_call.1} parent=1 // pred_fallthru
      _
    // Predicated region
    $region6: #{tpu_custom_call.1} parent=1 // pred_check
      _
    $region7: #{tpu_custom_call.1} parent=1 // pred_check_branch
      %26 = sbr.rel (0) target = $region9
    $region8: #{tpu_custom_call.1} parent=1 // pred_region
      %s28 = ssub.s32 128, 128
      %29 = vsyncadd [#allocation6], %s28
      %s31 = sshll.u32 [#allocation5], 4
      %s32 = int_to_ptr.vmem [resolvable:$true] %s31
      %34 = dma.hbm_to_vmem [thread:$0]  %s1, 128, %s32, [#allocation6]
    $region9: #{tpu_custom_call.1} parent=1 // pred_fallthru
      _
    // Predicated region
    $region10: #{tpu_custom_call.1} parent=1 // pred_check
      _
    $region11: #{tpu_custom_call.1} parent=1 // pred_check_branch
      %36 = sbr.rel (0) target = $region13
    $region12: #{tpu_custom_call.1} parent=1 // pred_region
      %s38 = ssub.s32 320, 320
      %39 = vsyncadd [#allocation6], %s38
      %s40 = sshll.u32 [#allocation7], 4
      %s41 = int_to_ptr.vmem [resolvable:$true] %s40
      %46 = dma.hbm_to_vmem [thread:$0]  %s2, 320, %s41, [#allocation6], 64, 64, 4
    $region13: #{tpu_custom_call.1} parent=1 // pred_fallthru
      _
    // Predicated region
    $region14: #{tpu_custom_call.1} parent=1 // pred_check
      _
    $region15: #{tpu_custom_call.1} parent=1 // pred_check_branch
      %48 = sbr.rel (0) target = $region17
    $region16: #{tpu_custom_call.1} parent=1 // pred_region
      %s50 = ssub.s32 1024, 1024
      %51 = vsyncadd [#allocation9], %s50
      %s52 = sshll.u32 [#allocation8], 4
      %s53 = int_to_ptr.vmem [resolvable:$true] %s52
      %58 = dma.hbm_to_vmem [thread:$0]  %s3, 1024, %s53, [#allocation9], 64, 64, 4
    $region17: #{tpu_custom_call.1} parent=1 // pred_fallthru
      _
    // Predicated region
    $region18: #{tpu_custom_call.1} parent=1 // pred_check
      _
    $region19: #{tpu_custom_call.1} parent=1 // pred_check_branch
      %60 = sbr.rel (0) target = $region21
    $region20: #{tpu_custom_call.1} parent=1 // pred_region
      %s62 = ssub.s32 1024, 1024
      %63 = vsyncadd [#allocation9], %s62
      %s64 = sshll.u32 [#allocation10], 4
      %s65 = int_to_ptr.vmem [resolvable:$true] %s64
      %70 = dma.hbm_to_vmem [thread:$0]  %s4, 1024, %s65, [#allocation9], 64, 64, 4
    $region21: #{tpu_custom_call.1} parent=1 // pred_fallthru
      _
    // Predicated region
    $region22: #{tpu_custom_call.1} parent=1 // pred_check
      _
    $region23: #{tpu_custom_call.1} parent=1 // pred_check_branch
      %72 = sbr.rel (0) target = $region25
    $region24: #{tpu_custom_call.1} parent=1 // pred_region
      _
    $region25: #{tpu_custom_call.1} parent=1 // pred_fallthru
      _
    // Predicated region
    $region26: #{tpu_custom_call.1} parent=1 // pred_check
      _
    $region27: #{tpu_custom_call.1} parent=1 // pred_check_branch
      %74 = sbr.rel (0) target = $region29
    $region28: #{tpu_custom_call.1} parent=1 // pred_region
      %75 = dma.done [#allocation3], 128
    $region29: #{tpu_custom_call.1} parent=1 // pred_fallthru
      _
    // Predicated region
    $region30: #{tpu_custom_call.1} parent=1 // pred_check
      _
    $region31: #{tpu_custom_call.1} parent=1 // pred_check_branch
      %77 = sbr.rel (0) target = $region33
    $region32: #{tpu_custom_call.1} parent=1 // pred_region
      %78 = dma.done [#allocation6], 128
    $region33: #{tpu_custom_call.1} parent=1 // pred_fallthru
      _
    // Predicated region
    $region34: #{tpu_custom_call.1} parent=1 // pred_check
      _
    $region35: #{tpu_custom_call.1} parent=1 // pred_check_branch
      %80 = sbr.rel (0) target = $region37
    $region36: #{tpu_custom_call.1} parent=1 // pred_region
      %81 = dma.done [#allocation6], 320
    $region37: #{tpu_custom_call.1} parent=1 // pred_fallthru
      _
    // Predicated region
    $region38: #{tpu_custom_call.1} parent=1 // pred_check
      _
    $region39: #{tpu_custom_call.1} parent=1 // pred_check_branch
      %83 = sbr.rel (0) target = $region41
    $region40: #{tpu_custom_call.1} parent=1 // pred_region
      %84 = dma.done [#allocation9], 1024
    $region41: #{tpu_custom_call.1} parent=1 // pred_fallthru
      _
    // Predicated region
    $region42: #{tpu_custom_call.1} parent=1 // pred_check
      _
    $region43: #{tpu_custom_call.1} parent=1 // pred_check_branch
      %86 = sbr.rel (0) target = $region45
    $region44: #{tpu_custom_call.1} parent=1 // pred_region
      %87 = dma.done [#allocation9], 1024
    $region45: #{tpu_custom_call.1} parent=1 // pred_fallthru
      _
    %v89 = vld [vmem:[#allocation2] sm:$0xff]
    %v90 = vld [vmem:[#allocation5] sm:$0xff]
    %v91 = vld [vmem:[%s5] sm:$0x1]
    %v92 = vld [vmem:[%s5 + $0x1] sm:$0x1]
    %v93 = vld [vmem:[%s5 + $0x2] sm:$0x1]
    %v94 = vld [vmem:[%s5 + $0x3] sm:$0x1]
    %v95 = vld [vmem:[%s5 + $0x4] sm:$0x1]
    %v96 = vpack.c.bf16 %v89, %v89
    %v97 = vld [vmem:[#allocation7] sm:$0xf]
    %v98 = vld [vmem:[#allocation7 + $0x4] sm:$0xf]
    %v99 = vld [vmem:[#allocation7 + $0x8] sm:$0xf]
    %v100 = vld [vmem:[#allocation7 + $0xc] sm:$0xf]
    %v101 = vpack.c.bf16 %v90, %v90
    %v102 = vld [vmem:[#allocation7 + $0x10] sm:$0xf]
    %vm103 = vcmask 64512
    %v105 = vsel %vm103, %v101, 0
    %vm107 = vcmask 1043456
    %v109 = vsel %vm107, %v102, 0
    %111 = vmatprep.subr.bf16.mxu0 0
    %112 = vmatpush1.bf16.msra.mxu0 %v109
    %113 = vmatprep.subr.bf16.mxu0 0
    %114 = vmatpush1.bf16.msra.mxu0 0
    %115 = vmatprep.subr.bf16.mxu0 0
    %116 = vmatpush1.bf16.msra.mxu0 0
    %117 = vmatprep.subr.bf16.mxu0 0
    %118 = vmatpush1.bf16.msra.mxu0 0
    %119 = vmatprep.subr.bf16.mxu0 0
    %120 = vmatpush1.bf16.msra.mxu0 0
    %121 = vmatprep.subr.bf16.mxu0 0
    %122 = vmatpush1.bf16.msra.mxu0 0
    %123 = vmatprep.subr.bf16.mxu0 0
    %124 = vmatpush1.bf16.msra.mxu0 0
    %125 = vmatprep.subr.bf16.mxu0 0
    %126 = vmatpush1.bf16.msra.mxu0 0
    %127 = vmatprep.subr.bf16.mxu0 0
    %128 = vmatpush1.bf16.msra.mxu0 0
    %129 = vmatprep.subr.bf16.mxu0 0
    %130 = vmatpush1.bf16.msra.mxu0 0
    %131 = vmatprep.subr.bf16.mxu0 0
    %132 = vmatpush1.bf16.msra.mxu0 0
    %133 = vmatprep.subr.bf16.mxu0 0
    %134 = vmatpush1.bf16.msra.mxu0 0
    %135 = vmatprep.subr.bf16.mxu0 0
    %136 = vmatpush1.bf16.msra.mxu0 0
    %137 = vmatprep.subr.bf16.mxu0 0
    %138 = vmatpush1.bf16.msra.mxu0 0
    %139 = vmatprep.subr.bf16.mxu0 0
    %140 = vmatpush1.bf16.msra.mxu0 0
    %141 = vmatprep.subr.bf16.mxu0 0
    %142 = vmatpush1.bf16.msra.mxu0 0
    %143 = vmatprep.mubr.bf16.mxu0 0
    %144 = vmatmul.mubr.bf16.gmra.mrb[0].mxu0 %v105
    %v145 = vpop.f32.mrb[0].mxu0
    %v146 = vadd.f32 0.0, %v145
    %v147 = vpop.f32.mrb[0].mxu0
    %v148 = vpop.f32.mrb[0].mxu0
    %v149 = vpop.f32.mrb[0].mxu0
    %150 = vdwg.mxu0
    %v155 = vunpack.c.l.b16 %v97
    %v156 = vunpack.c.l.b16 %v98
    %v157 = vunpack.c.l.b16 %v99
    %v158 = vunpack.c.l.b16 %v100
    %v159 = vpack.c.b16 %v156, %v155
    %v160 = vpack.c.b16 %v158, %v157
    %vm163 = vcmask 261120
    %v165 = vsel %vm163, %v96, 0
    %167 = vmatprep.subr.bf16.mxu0 0
    %168 = vmatpush1.bf16.msra.mxu0 %v159
    %169 = vmatprep.subr.bf16.mxu0 0
    %170 = vmatpush1.bf16.msra.mxu0 %v160
    %171 = vmatprep.subr.bf16.mxu0 0
    %172 = vmatpush1.bf16.msra.mxu0 0
    %173 = vmatprep.subr.bf16.mxu0 0
    %174 = vmatpush1.bf16.msra.mxu0 0
    %175 = vmatprep.subr.bf16.mxu0 0
    %176 = vmatpush1.bf16.msra.mxu0 0
    %177 = vmatprep.subr.bf16.mxu0 0
    %178 = vmatpush1.bf16.msra.mxu0 0
    %179 = vmatprep.subr.bf16.mxu0 0
    %180 = vmatpush1.bf16.msra.mxu0 0
    %181 = vmatprep.subr.bf16.mxu0 0
    %182 = vmatpush1.bf16.msra.mxu0 0
    %183 = vmatprep.subr.bf16.mxu0 0
    %184 = vmatpush1.bf16.msra.mxu0 0
    %185 = vmatprep.subr.bf16.mxu0 0
    %186 = vmatpush1.bf16.msra.mxu0 0
    %187 = vmatprep.subr.bf16.mxu0 0
    %188 = vmatpush1.bf16.msra.mxu0 0
    %189 = vmatprep.subr.bf16.mxu0 0
    %190 = vmatpush1.bf16.msra.mxu0 0
    %191 = vmatprep.subr.bf16.mxu0 0
    %192 = vmatpush1.bf16.msra.mxu0 0
    %193 = vmatprep.subr.bf16.mxu0 0
    %194 = vmatpush1.bf16.msra.mxu0 0
    %195 = vmatprep.subr.bf16.mxu0 0
    %196 = vmatpush1.bf16.msra.mxu0 0
    %197 = vmatprep.subr.bf16.mxu0 0
    %198 = vmatpush1.bf16.msra.mxu0 0
    %199 = vmatprep.mubr.bf16.mxu0 0
    %200 = vmatmul.mubr.bf16.gmra.mrb[0].mxu0 %v165
    %v201 = vpop.f32.mrb[0].mxu0
    %v202 = vadd.f32 %v146, %v201
    %v203 = vpop.f32.mrb[0].mxu0
    %v204 = vpop.f32.mrb[0].mxu0
    %v205 = vpop.f32.mrb[0].mxu0
    %206 = vdwg.mxu0
    %v207 = vrot.slane %v202, 4
    %v208 = vadd.f32 %v202, %v207
    %v209 = vrot.slane %v208, 2
    %v210 = vadd.f32 %v208, %v209
    %v211 = vrot.slane %v210, 1
    %v212 = vadd.f32 %v210, %v211
    %v213 = vrcp.pop 8.0
    %v214 = vmul.f32 %v212, %v213
    %v215 = vmul.f32 %v202, %v202
    %v216 = vrot.slane %v215, 4
    %v217 = vadd.f32 %v215, %v216
    %v218 = vrot.slane %v217, 2
    %v219 = vadd.f32 %v217, %v218
    %v220 = vrot.slane %v219, 1
    %v221 = vadd.f32 %v219, %v220
    %v222 = vmul.f32 %v221, %v213
    %v223 = vmul.f32 %v214, %v214
    %v224 = vsub.f32 %v222, %v223
    %v225 = vmax.f32 %v224, 0.0
    %v226 = vsub.f32 %v202, %v214
    %v227 = vadd.f32 %v225, 1e-05
    %v228 = vrsqrt.pop %v227
    %v229 = vmul.f32 %v226, %v228
    %v230 = vlaneseq
    %v231 = vshrl.u32 %v230, 7
    %v232 = vsub.s32 0, %v231
    %v233 = vrot.slane %v91, %v232
    %v234 = vmul.f32 %v229, %v233
    %v235 = vlaneseq
    %v236 = vshrl.u32 %v235, 7
    %v237 = vsub.s32 0, %v236
    %v238 = vrot.slane %v92, %v237
    %v239 = vadd.f32 %v234, %v238
    %v240 = vmax.f32 %v239, 0.0
    %v241 = vpack.c.bf16 %v240, %v240
    %v242 = vld [vmem:[#allocation8] sm:$0xf]
    %v243 = vld [vmem:[#allocation8 + $0x4] sm:$0xf]
    %v244 = vld [vmem:[#allocation8 + $0x8] sm:$0xf]
    %v245 = vld [vmem:[#allocation8 + $0xc] sm:$0xf]
    %v246 = vld [vmem:[#allocation8 + $0x10] sm:$0xf]
    %v247 = vld [vmem:[#allocation8 + $0x14] sm:$0xf]
    %v248 = vld [vmem:[#allocation8 + $0x18] sm:$0xf]
    %v249 = vld [vmem:[#allocation8 + $0x1c] sm:$0xf]
    %v250 = vld [vmem:[#allocation8 + $0x20] sm:$0xf]
    %v251 = vld [vmem:[#allocation8 + $0x24] sm:$0xf]
    %v252 = vld [vmem:[#allocation8 + $0x28] sm:$0xf]
    %v253 = vld [vmem:[#allocation8 + $0x2c] sm:$0xf]
    %v254 = vld [vmem:[#allocation8 + $0x30] sm:$0xf]
    %v255 = vld [vmem:[#allocation8 + $0x34] sm:$0xf]
    %v256 = vld [vmem:[#allocation8 + $0x38] sm:$0xf]
    %v257 = vld [vmem:[#allocation8 + $0x3c] sm:$0xf]
    %v274 = vunpack.c.l.b16 %v242
    %v275 = vunpack.c.l.b16 %v243
    %v276 = vunpack.c.l.b16 %v244
    %v277 = vunpack.c.l.b16 %v245
    %v278 = vunpack.c.l.b16 %v246
    %v279 = vunpack.c.l.b16 %v247
    %v280 = vunpack.c.l.b16 %v248
    %v281 = vunpack.c.l.b16 %v249
    %v282 = vunpack.c.l.b16 %v250
    %v283 = vunpack.c.l.b16 %v251
    %v284 = vunpack.c.l.b16 %v252
    %v285 = vunpack.c.l.b16 %v253
    %v286 = vunpack.c.l.b16 %v254
    %v287 = vunpack.c.l.b16 %v255
    %v288 = vunpack.c.l.b16 %v256
    %v289 = vunpack.c.l.b16 %v257
    %v290 = vpack.c.b16 %v275, %v274
    %v291 = vpack.c.b16 %v277, %v276
    %v292 = vpack.c.b16 %v279, %v278
    %v293 = vpack.c.b16 %v281, %v280
    %v294 = vpack.c.b16 %v283, %v282
    %v295 = vpack.c.b16 %v285, %v284
    %v296 = vpack.c.b16 %v287, %v286
    %v297 = vpack.c.b16 %v289, %v288
    %306 = vmatprep.subr.bf16.mxu0 0
    %307 = vmatpush1.bf16.msra.mxu0 %v290
    %308 = vmatprep.subr.bf16.mxu0 0
    %309 = vmatpush1.bf16.msra.mxu0 %v291
    %310 = vmatprep.subr.bf16.mxu0 0
    %311 = vmatpush1.bf16.msra.mxu0 %v292
    %312 = vmatprep.subr.bf16.mxu0 0
    %313 = vmatpush1.bf16.msra.mxu0 %v293
    %314 = vmatprep.subr.bf16.mxu0 0
    %315 = vmatpush1.bf16.msra.mxu0 %v294
    %316 = vmatprep.subr.bf16.mxu0 0
    %317 = vmatpush1.bf16.msra.mxu0 %v295
    %318 = vmatprep.subr.bf16.mxu0 0
    %319 = vmatpush1.bf16.msra.mxu0 %v296
    %320 = vmatprep.subr.bf16.mxu0 0
    %321 = vmatpush1.bf16.msra.mxu0 %v297
    %322 = vmatprep.subr.bf16.mxu0 0
    %323 = vmatpush1.bf16.msra.mxu0 0
    %324 = vmatprep.subr.bf16.mxu0 0
    %325 = vmatpush1.bf16.msra.mxu0 0
    %326 = vmatprep.subr.bf16.mxu0 0
    %327 = vmatpush1.bf16.msra.mxu0 0
    %328 = vmatprep.subr.bf16.mxu0 0
    %329 = vmatpush1.bf16.msra.mxu0 0
    %330 = vmatprep.subr.bf16.mxu0 0
    %331 = vmatpush1.bf16.msra.mxu0 0
    %332 = vmatprep.subr.bf16.mxu0 0
    %333 = vmatpush1.bf16.msra.mxu0 0
    %334 = vmatprep.subr.bf16.mxu0 0
    %335 = vmatpush1.bf16.msra.mxu0 0
    %336 = vmatprep.subr.bf16.mxu0 0
    %337 = vmatpush1.bf16.msra.mxu0 0
    %338 = vmatprep.mubr.bf16.mxu0 0
    %339 = vmatmul.mubr.bf16.gmra.mrb[0].mxu0 %v241
    %v340 = vpop.f32.mrb[0].mxu0
    %v341 = vadd.f32 0.0, %v340
    %v342 = vpop.f32.mrb[0].mxu0
    %v343 = vpop.f32.mrb[0].mxu0
    %v344 = vpop.f32.mrb[0].mxu0
    %345 = vdwg.mxu0
    %v346 = vrot.slane %v341, 4
    %v347 = vadd.f32 %v341, %v346
    %v348 = vrot.slane %v347, 2
    %v349 = vadd.f32 %v347, %v348
    %v350 = vrot.slane %v349, 1
    %v351 = vadd.f32 %v349, %v350
    %v352 = vmul.f32 %v351, %v213
    %v353 = vmul.f32 %v341, %v341
    %v354 = vrot.slane %v353, 4
    %v355 = vadd.f32 %v353, %v354
    %v356 = vrot.slane %v355, 2
    %v357 = vadd.f32 %v355, %v356
    %v358 = vrot.slane %v357, 1
    %v359 = vadd.f32 %v357, %v358
    %v360 = vmul.f32 %v359, %v213
    %v361 = vmul.f32 %v352, %v352
    %v362 = vsub.f32 %v360, %v361
    %v363 = vmax.f32 %v362, 0.0
    %v364 = vsub.f32 %v341, %v352
    %v365 = vadd.f32 %v363, 1e-05
    %v366 = vrsqrt.pop %v365
    %v367 = vmul.f32 %v364, %v366
    %v368 = vlaneseq
    %v369 = vshrl.u32 %v368, 7
    %v370 = vsub.s32 0, %v369
    %v371 = vrot.slane %v93, %v370
    %v372 = vmul.f32 %v367, %v371
    %v373 = vlaneseq
    %v374 = vshrl.u32 %v373, 7
    %v375 = vsub.s32 0, %v374
    %v376 = vrot.slane %v94, %v375
    %v377 = vadd.f32 %v372, %v376
    %v378 = vmax.f32 %v377, 0.0
    %v379 = vpack.c.bf16 %v378, %v378
    %v380 = vld [vmem:[#allocation10] sm:$0xf]
    %v381 = vld [vmem:[#allocation10 + $0x4] sm:$0xf]
    %v382 = vld [vmem:[#allocation10 + $0x8] sm:$0xf]
    %v383 = vld [vmem:[#allocation10 + $0xc] sm:$0xf]
    %v384 = vld [vmem:[#allocation10 + $0x10] sm:$0xf]
    %v385 = vld [vmem:[#allocation10 + $0x14] sm:$0xf]
    %v386 = vld [vmem:[#allocation10 + $0x18] sm:$0xf]
    %v387 = vld [vmem:[#allocation10 + $0x1c] sm:$0xf]
    %v388 = vld [vmem:[#allocation10 + $0x20] sm:$0xf]
    %v389 = vld [vmem:[#allocation10 + $0x24] sm:$0xf]
    %v390 = vld [vmem:[#allocation10 + $0x28] sm:$0xf]
    %v391 = vld [vmem:[#allocation10 + $0x2c] sm:$0xf]
    %v392 = vld [vmem:[#allocation10 + $0x30] sm:$0xf]
    %v393 = vld [vmem:[#allocation10 + $0x34] sm:$0xf]
    %v394 = vld [vmem:[#allocation10 + $0x38] sm:$0xf]
    %v395 = vld [vmem:[#allocation10 + $0x3c] sm:$0xf]
    %v396 = vlaneseq
    %v397 = vshrl.u32 %v396, 7
    %v398 = vsub.s32 0, %v397
    %v399 = vrot.slane %v95, %v398
    %v416 = vunpack.c.l.b16 %v380
    %v417 = vunpack.c.l.b16 %v381
    %v418 = vunpack.c.l.b16 %v382
    %v419 = vunpack.c.l.b16 %v383
    %v420 = vunpack.c.l.b16 %v384
    %v421 = vunpack.c.l.b16 %v385
    %v422 = vunpack.c.l.b16 %v386
    %v423 = vunpack.c.l.b16 %v387
    %v424 = vunpack.c.l.b16 %v388
    %v425 = vunpack.c.l.b16 %v389
    %v426 = vunpack.c.l.b16 %v390
    %v427 = vunpack.c.l.b16 %v391
    %v428 = vunpack.c.l.b16 %v392
    %v429 = vunpack.c.l.b16 %v393
    %v430 = vunpack.c.l.b16 %v394
    %v431 = vunpack.c.l.b16 %v395
    %v432 = vpack.c.b16 %v417, %v416
    %v433 = vpack.c.b16 %v419, %v418
    %v434 = vpack.c.b16 %v421, %v420
    %v435 = vpack.c.b16 %v423, %v422
    %v436 = vpack.c.b16 %v425, %v424
    %v437 = vpack.c.b16 %v427, %v426
    %v438 = vpack.c.b16 %v429, %v428
    %v439 = vpack.c.b16 %v431, %v430
    %448 = vmatprep.subr.bf16.mxu0 0
    %449 = vmatpush1.bf16.msra.mxu0 %v432
    %450 = vmatprep.subr.bf16.mxu0 0
    %451 = vmatpush1.bf16.msra.mxu0 %v433
    %452 = vmatprep.subr.bf16.mxu0 0
    %453 = vmatpush1.bf16.msra.mxu0 %v434
    %454 = vmatprep.subr.bf16.mxu0 0
    %455 = vmatpush1.bf16.msra.mxu0 %v435
    %456 = vmatprep.subr.bf16.mxu0 0
    %457 = vmatpush1.bf16.msra.mxu0 %v436
    %458 = vmatprep.subr.bf16.mxu0 0
    %459 = vmatpush1.bf16.msra.mxu0 %v437
    %460 = vmatprep.subr.bf16.mxu0 0
    %461 = vmatpush1.bf16.msra.mxu0 %v438
    %462 = vmatprep.subr.bf16.mxu0 0
    %463 = vmatpush1.bf16.msra.mxu0 %v439
    %464 = vmatprep.subr.bf16.mxu0 0
    %465 = vmatpush1.bf16.msra.mxu0 0
    %466 = vmatprep.subr.bf16.mxu0 0
    %467 = vmatpush1.bf16.msra.mxu0 0
    %468 = vmatprep.subr.bf16.mxu0 0
    %469 = vmatpush1.bf16.msra.mxu0 0
    %470 = vmatprep.subr.bf16.mxu0 0
    %471 = vmatpush1.bf16.msra.mxu0 0
    %472 = vmatprep.subr.bf16.mxu0 0
    %473 = vmatpush1.bf16.msra.mxu0 0
    %474 = vmatprep.subr.bf16.mxu0 0
    %475 = vmatpush1.bf16.msra.mxu0 0
    %476 = vmatprep.subr.bf16.mxu0 0
    %477 = vmatpush1.bf16.msra.mxu0 0
    %478 = vmatprep.subr.bf16.mxu0 0
    %479 = vmatpush1.bf16.msra.mxu0 0
    %480 = vmatprep.mubr.bf16.mxu0 0
    %481 = vmatmul.mubr.bf16.gmra.mrb[0].mxu0 %v379
    %v482 = vpop.f32.mrb[0].mxu0
    %v483 = vadd.f32 %v399, %v482
    %v484 = vpop.f32.mrb[0].mxu0
    %v485 = vpop.f32.mrb[0].mxu0
    %v486 = vpop.f32.mrb[0].mxu0
    %487 = vdwg.mxu0
    %488 = vst [vmem:[#allocation11] sm:$0xff] %v483
    // Predicated region
    $region46: #{tpu_custom_call.1} parent=1 // pred_check
      _
    $region47: #{tpu_custom_call.1} parent=1 // pred_check_branch
      %490 = sbr.rel (0) target = $region49
    $region48: #{tpu_custom_call.1} parent=1 // pred_region
      %s492 = ssub.s32 128, 128
      %493 = vsyncadd [#allocation4], %s492
      %s495 = sshll.u32 [#allocation11], 4
      %s496 = int_to_ptr.vmem [resolvable:$true] %s495
      %498 = dma.vmem_to_hbm [thread:$0]  %s496, 128, %s6, [#allocation4]
    $region49: #{tpu_custom_call.1} parent=1 // pred_fallthru
      _
    // Predicated region
    $region50: #{tpu_custom_call.1} parent=1 // pred_check
      _
    $region51: #{tpu_custom_call.1} parent=1 // pred_check_branch
      %500 = sbr.rel (0) target = $region53
    $region52: #{tpu_custom_call.1} parent=1 // pred_region
      %501 = dma.done [#allocation4], 128
    $region53: #{tpu_custom_call.1} parent=1 // pred_fallthru
      _
    %502 = vsyncpa [#allocation3], 1
    %503 = vsyncpa [#allocation6], 1
    %504 = vsyncpa [#allocation9], 1
    %505 = vsyncpa [#allocation4], 1

</llo_original>
